<compile_context>
chip_gen: v7x
topology: tpu7x:2x2x1
jax: 0.10.0
libtpu: 0.0.40
codegen_flags: <defaults>
</compile_context>

<pallas_src>
import jax
import jax.numpy as jnp
from jax.experimental import pallas as pl
from jax.experimental.pallas import tpu as pltpu


def _round_up(x: int, m: int) -> int:
    return ((x + m - 1) // m) * m


def _choose_tm(M: int, *, itemsize: int = 2, target_tiles: int = 2, cap: int = 512) -> int:
    """Rows per grid step.

    - multiple of the native sublane tile (8 for 4-byte, 16 for 2-byte dtypes),
    - capped at `cap` (per-step overhead already amortized; VMEM stays tiny),
    - aims for >= `target_tiles` grid steps so v7x's two TensorCores both get
      work on the parallel M axis (v5e/v6e are single-TC, unaffected).
    """
    sub = 8 if itemsize >= 4 else 16
    tm = _round_up(max(1, pl.cdiv(M, target_tiles)), sub)
    return max(sub, min(cap, tm))


# ----------------------------- Pallas kernel: dense (Linear) -----------------------------
def dense_kernel(x_ref, w_ref, b_ref, o_ref):
    # x_ref: (TM, H) activation tile (bf16 expected from producer)
    # w_ref: (H, H) weight, stored (in, out), bf16, grid-invariant
    # b_ref: (1, H) bias, f32
    # o_ref: (TM, H) output tile (same dtype as input, bf16 in the fast path)
    x = x_ref[...]
    if x.dtype != jnp.bfloat16:
        # Fallback only: cast in-VMEM (no extra HBM pass). Preferred path is bf16 input.
        x = x.astype(jnp.bfloat16)
    acc = jnp.dot(x, w_ref[...], preferred_element_type=jnp.float32)   # f32 accumulation
    o_ref[...] = (acc + b_ref[...]).astype(o_ref.dtype)                # f32 bias add


def dense_pallas(x2d, w, b, *, tm):
    """y = x2d @ w + b, x2d: (M, H). Ragged last M block is masked by Pallas."""
    M, H = x2d.shape
    grid = (pl.cdiv(M, tm),)
    out_dtype = x2d.dtype

    cost = pl.CostEstimate(
        flops=2 * M * H * H,
        transcendentals=0,
        bytes_accessed=(M * H * x2d.dtype.itemsize          # activation read
                        + H * H * w.dtype.itemsize          # weight read
                        + H * b.dtype.itemsize              # bias read
                        + M * H * jnp.dtype(out_dtype).itemsize),   # output write
    )

    def build(single_buffer_weight: bool):
        # Grid-invariant weight: constant index_map -> single buffer is enough.
        w_kwargs = {"pipeline_mode": pl.Buffered(1)} if single_buffer_weight else {}
        return pl.pallas_call(
            dense_kernel,
            out_shape=jax.ShapeDtypeStruct((M, H), out_dtype),
            grid_spec=pltpu.PrefetchScalarGridSpec(
                num_scalar_prefetch=0,
                grid=grid,
                in_specs=[
                    pl.BlockSpec((tm, H), lambda i: (i, 0)),             # activation M-tile
                    pl.BlockSpec((H, H), lambda i: (0, 0), **w_kwargs),  # weight, resident
                    pl.BlockSpec((1, H), lambda i: (0, 0)),              # bias, resident
                ],
                out_specs=pl.BlockSpec((tm, H), lambda i: (i, 0)),       # lane-dense (.., H)
            ),
            compiler_params=pltpu.CompilerParams(
                dimension_semantics=("parallel",),            # M tiles shard across TCs
                vmem_limit_bytes=48 * 1024 * 1024,            # v7x-safe (64 MiB physical)
            ),
            cost_estimate=cost,
        )

    try:
        return build(True)(x2d, w, b)
    except Exception:
        # pl.Buffered(1) unsupported on this jax/Mosaic version -> default double-buffer.
        return build(False)(x2d, w, b)


# ----------------------------- Module wrapper -----------------------------
class ViTSelfOutputPallas:
    def __init__(self, hidden_size, key, hidden_dropout_prob=0.0):
        self.hidden_size = hidden_size
        self.hidden_dropout_prob = hidden_dropout_prob    # eval mode -> identity
        k1, k2 = jax.random.split(key)
        std = 0.02
        # Weight stored (in, out) so y = x @ W + b; bf16 by explicit (inference) choice.
        w_f32 = std * jax.random.normal(k1, (hidden_size, hidden_size), jnp.float32)
        self.w = w_f32.astype(jnp.bfloat16)
        self.b = std * jax.random.normal(k2, (1, hidden_size), jnp.float32)

    def __call__(self, hidden_states, input_tensor=None):
        # input_tensor is accepted but unused, exactly like the PyTorch module
        # (residual connection lives in ViTLayer).
        B, S, H = hidden_states.shape
        M = B * S
        x2d = hidden_states.reshape(M, H)        # no pad / slice; ragged tail is masked
        tm = _choose_tm(M, itemsize=hidden_states.dtype.itemsize)
        y2d = dense_pallas(x2d, self.w, self.b, tm=tm)

        # Dropout: eval-mode identity.
        # TODO(synk): training-mode dropout (pltpu.prng_seed + pltpu.stateful_bernoulli)
        #             not implemented; reference module in .eval() is identity.
        return y2d.reshape(B, S, H)


# ----------------------------- Pure-JAX reference -----------------------------
def reference_forward(mod, hidden_states, input_tensor=None):
    x = hidden_states.astype(jnp.float32)
    w = mod.w.astype(jnp.float32)
    return x @ w + mod.b[0]


if __name__ == "__main__":
    # Small but lane-dense: H = 128 (multiple of 128 lanes), B*S = 16 rows.
    B, S, H = 2, 8, 128
    key = jax.random.PRNGKey(0)
    k_x, k_r, k_w = jax.random.split(key, 3)
    # Producer-side bf16 activations (bf16 HBM I/O end-to-end, per perf review).
    hidden_states = jax.random.normal(k_x, (B, S, H), jnp.float32).astype(jnp.bfloat16)
    input_tensor = jax.random.normal(k_r, (B, S, H), jnp.float32).astype(jnp.bfloat16)  # unused

    mod = ViTSelfOutputPallas(H, k_w, hidden_dropout_prob=0.0)
    out = mod(hidden_states, input_tensor)
    out = jax.block_until_ready(out)

    ref = reference_forward(mod, hidden_states, input_tensor)
    assert out.shape == (B, S, H)
    assert out.dtype == jnp.bfloat16
    # bf16 inputs/weights with f32 accumulation; only the final bf16 store rounds.
    err = float(jnp.max(jnp.abs(out.astype(jnp.float32) - ref)))
    assert err < 1e-2, err
    print("KERNEL_OK")
</pallas_src>

<mosaic_0001>
module attributes {stable_mosaic.version = 11 : i64} {
  func.func @dense_kernel(%arg0: i32, %arg1: memref<16x128xbf16, #tpu.memory_space<vmem>>, %arg2: memref<128x128xbf16, #tpu.memory_space<vmem>>, %arg3: memref<1x128xf32, #tpu.memory_space<vmem>>, %arg4: memref<16x128xbf16, #tpu.memory_space<vmem>>) attributes {dimension_semantics = [#tpu.dimension_semantics<parallel>], iteration_bounds = array<i64: 1>, scalar_prefetch = 0 : i64, scratch_operands = 0 : i64, tpu.core_type = #tpu.core_type<tc>, window_params = [{transform_indices = @transform_0, window_bounds = array<i64: 16, 128>}, {pipeline_mode = #tpu.pipeline_mode<synchronous>, transform_indices = @transform_1, window_bounds = array<i64: 128, 128>}, {pipeline_mode = #tpu.pipeline_mode<synchronous>, transform_indices = @transform_2, window_bounds = array<i64: 1, 128>}, {transform_indices = @transform_3, window_bounds = array<i64: 16, 128>}]} {
    %c0 = arith.constant 0 : index
    %c0_0 = arith.constant 0 : index
    %0 = vector.load %arg1[%c0, %c0_0] : memref<16x128xbf16, #tpu.memory_space<vmem>>, vector<16x128xbf16>
    %c0_1 = arith.constant 0 : index
    %c0_2 = arith.constant 0 : index
    %1 = vector.load %arg2[%c0_1, %c0_2] : memref<128x128xbf16, #tpu.memory_space<vmem>>, vector<128x128xbf16>
    %cst = arith.constant dense<0.000000e+00> : vector<16x128xf32>
    %2 = tpu.matmul %0, %1, %cst {dimension_numbers = #tpu.dot_dimension_numbers<[1], [0], [0], [1], [0, 0, 1, 1], [], []>} : vector<16x128xbf16>, vector<128x128xbf16>, vector<16x128xf32> -> vector<16x128xf32>
    %c0_3 = arith.constant 0 : index
    %c0_4 = arith.constant 0 : index
    %3 = vector.load %arg3[%c0_3, %c0_4] : memref<1x128xf32, #tpu.memory_space<vmem>>, vector<1x128xf32>
    %4 = vector.broadcast %3 : vector<1x128xf32> to vector<16x128xf32>
    %5 = arith.addf %2, %4 : vector<16x128xf32>
    %6 = arith.truncf %5 : vector<16x128xf32> to vector<16x128xbf16>
    %c0_5 = arith.constant 0 : index
    %c0_6 = arith.constant 0 : index
    %7 = vector.load %arg4[%c0_5, %c0_6] : memref<16x128xbf16, #tpu.memory_space<vmem>>, vector<16x128xbf16>
    tpu.vector_store %arg4[%c0_5, %c0_6], %6 {strides = array<i32>} : memref<16x128xbf16, #tpu.memory_space<vmem>>, vector<16x128xbf16>,
    return
  }
  func.func @transform_0(%arg0: i32) -> (i32, i32) {
    %c0_i32 = arith.constant 0 : i32
    %c0_i32_0 = arith.constant 0 : i32
    return %arg0, %c0_i32 : i32, i32
  }
  func.func @transform_1(%arg0: i32) -> (i32, i32) {
    %c0_i32 = arith.constant 0 : i32
    %c0_i32_0 = arith.constant 0 : i32
    %c0_i32_1 = arith.constant 0 : i32
    return %c0_i32, %c0_i32_0 : i32, i32
  }
  func.func @transform_2(%arg0: i32) -> (i32, i32) {
    %c0_i32 = arith.constant 0 : i32
    %c0_i32_0 = arith.constant 0 : i32
    %c0_i32_1 = arith.constant 0 : i32
    return %c0_i32, %c0_i32_0 : i32, i32
  }
  func.func @transform_3(%arg0: i32) -> (i32, i32) {
    %c0_i32 = arith.constant 0 : i32
    %c0_i32_0 = arith.constant 0 : i32
    return %arg0, %c0_i32 : i32, i32
  }
}

module attributes {stable_mosaic.version = 11 : i64} {
  func.func @dense_kernel(%arg0: i32, %arg1: memref<16x128xbf16, #tpu.memory_space<vmem>>, %arg2: memref<128x128xbf16, #tpu.memory_space<vmem>>, %arg3: memref<1x128xf32, #tpu.memory_space<vmem>>, %arg4: memref<16x128xbf16, #tpu.memory_space<vmem>>) attributes {dimension_semantics = [#tpu.dimension_semantics<parallel>], iteration_bounds = array<i64: 1>, scalar_prefetch = 0 : i64, scratch_operands = 0 : i64, tpu.core_type = #tpu.core_type<tc>, window_params = [{transform_indices = @transform_0, window_bounds = array<i64: 16, 128>}, {pipeline_mode = #tpu.pipeline_mode<synchronous>, transform_indices = @transform_1, window_bounds = array<i64: 128, 128>}, {pipeline_mode = #tpu.pipeline_mode<synchronous>, transform_indices = @transform_2, window_bounds = array<i64: 1, 128>}, {transform_indices = @transform_3, window_bounds = array<i64: 16, 128>}]} {
    %c0 = arith.constant 0 : index
    %c0_0 = arith.constant 0 : index
    %0 = vector.load %arg1[%c0, %c0_0] : memref<16x128xbf16, #tpu.memory_space<vmem>>, vector<16x128xbf16>
    %c0_1 = arith.constant 0 : index
    %c0_2 = arith.constant 0 : index
    %1 = vector.load %arg2[%c0_1, %c0_2] : memref<128x128xbf16, #tpu.memory_space<vmem>>, vector<128x128xbf16>
    %cst = arith.constant dense<0.000000e+00> : vector<16x128xf32>
    %2 = tpu.matmul %0, %1, %cst {dimension_numbers = #tpu.dot_dimension_numbers<[1], [0], [0], [1], [0, 0, 1, 1], [], []>} : vector<16x128xbf16>, vector<128x128xbf16>, vector<16x128xf32> -> vector<16x128xf32>
    %c0_3 = arith.constant 0 : index
    %c0_4 = arith.constant 0 : index
    %3 = vector.load %arg3[%c0_3, %c0_4] : memref<1x128xf32, #tpu.memory_space<vmem>>, vector<1x128xf32>
    %4 = vector.broadcast %3 : vector<1x128xf32> to vector<16x128xf32>
    %5 = arith.addf %2, %4 : vector<16x128xf32>
    %6 = arith.truncf %5 : vector<16x128xf32> to vector<16x128xbf16>
    %c0_5 = arith.constant 0 : index
    %c0_6 = arith.constant 0 : index
    %7 = vector.load %arg4[%c0_5, %c0_6] : memref<16x128xbf16, #tpu.memory_space<vmem>>, vector<16x128xbf16>
    tpu.vector_store %arg4[%c0_5, %c0_6], %6 {strides = array<i32>} : memref<16x128xbf16, #tpu.memory_space<vmem>>, vector<16x128xbf16>,
    return
  }
  func.func @transform_0(%arg0: i32) -> (i32, i32) {
    %c0_i32 = arith.constant 0 : i32
    %c0_i32_0 = arith.constant 0 : i32
    return %arg0, %c0_i32 : i32, i32
  }
  func.func @transform_1(%arg0: i32) -> (i32, i32) {
    %c0_i32 = arith.constant 0 : i32
    %c0_i32_0 = arith.constant 0 : i32
    %c0_i32_1 = arith.constant 0 : i32
    return %c0_i32, %c0_i32_0 : i32, i32
  }
  func.func @transform_2(%arg0: i32) -> (i32, i32) {
    %c0_i32 = arith.constant 0 : i32
    %c0_i32_0 = arith.constant 0 : i32
    %c0_i32_1 = arith.constant 0 : i32
    return %c0_i32, %c0_i32_0 : i32, i32
  }
  func.func @transform_3(%arg0: i32) -> (i32, i32) {
    %c0_i32 = arith.constant 0 : i32
    %c0_i32_0 = arith.constant 0 : i32
    return %arg0, %c0_i32 : i32, i32
  }
}

</mosaic_0001>

<llo_original>
// kernel: tpu_custom_call.1
$region0: #{tpu_custom_call.1}
  #allocation0 [shape = 'u32[]', space=smem, size = 0x4, offset = 0x4, fixed_abs, tag = 'smem constant byte address 0x4 - core index']
  #allocation1 [shape = 'u32[144,128]{1,0:T(1,128)}', space=vmem, size = 0x12000, scoped, tag = 'internal scratch']
  %s0 = inlined_call_operand.hbm [shape: bf16[16,128], index: 0, kind: input, shape index: {}]
  %s1 = inlined_call_operand.hbm [shape: bf16[128,128], index: 1, kind: input, shape index: {}]
  %s2 = inlined_call_operand.vmem [shape: f32[1,128], index: 2, kind: input, shape index: {}]
  %s3 = inlined_call_operand.hbm [shape: bf16[16,128], index: 3, kind: output, shape index: {}]
  %s4 = sld [smem:[#allocation0]]
  $region30: #{tpu_custom_call.1} parent=0
    _
  %s6 = ssub.s32 1, %s4
  %s7 = scalar_select 0, %s6, %s4
  $region1: #{tpu_custom_call.1} parent=0
    #allocation2 [shape = 'u8[4096]{0}', space=vmem, size = 0x1000, scoped, tag = 'input window, operand 0, single buffered']
    #allocation3 [shape = 's32[1]{0}', space=sflag, size = 0x4, scoped, tag = 'scoped memory for tpu_custom_call.1']
    #allocation4 [shape = 's32[1]{0}', space=sflag, size = 0x4, scoped, tag = 'scoped memory for tpu_custom_call.1']
    #allocation5 [shape = 'u8[32768]{0}', space=vmem, size = 0x8000, scoped, tag = 'input window, operand 1, single buffered']
    #allocation6 [shape = 's32[1]{0}', space=sflag, size = 0x4, scoped, tag = 'scoped memory for tpu_custom_call.1']
    #allocation7 [shape = 'u8[4096]{0}', space=vmem, size = 0x1000, scoped, tag = 'output window, operand 0, single buffered']
    %8 = vsyncpa [#allocation3], 0
    %9 = vsyncpa [#allocation6], 0
    %10 = vsyncpa [#allocation4], 0
    // Predicated region
    $region2: #{tpu_custom_call.1} parent=1 // pred_check
      _
    $region3: #{tpu_custom_call.1} parent=1 // pred_check_branch
      %12 = sbr.rel (0) target = $region5
    $region4: #{tpu_custom_call.1} parent=1 // pred_region
      %s14 = ssub.s32 128, 128
      %15 = vsyncadd [#allocation3], %s14
      %s16 = sshll.u32 [#allocation2], 4
      %s17 = int_to_ptr.vmem [resolvable:$true] %s16
      %22 = dma.hbm_to_vmem [thread:$0]  %s0, 128, %s17, [#allocation3], 64, 64, 4
    $region5: #{tpu_custom_call.1} parent=1 // pred_fallthru
      _
    // Predicated region
    $region6: #{tpu_custom_call.1} parent=1 // pred_check
      _
    $region7: #{tpu_custom_call.1} parent=1 // pred_check_branch
      %24 = sbr.rel (0) target = $region9
    $region8: #{tpu_custom_call.1} parent=1 // pred_region
      %s26 = ssub.s32 1024, 1024
      %27 = vsyncadd [#allocation6], %s26
      %s28 = sshll.u32 [#allocation5], 4
      %s29 = int_to_ptr.vmem [resolvable:$true] %s28
      %34 = dma.hbm_to_vmem [thread:$0]  %s1, 1024, %s29, [#allocation6], 64, 64, 4
    $region9: #{tpu_custom_call.1} parent=1 // pred_fallthru
      _
    // Predicated region
    $region10: #{tpu_custom_call.1} parent=1 // pred_check
      _
    $region11: #{tpu_custom_call.1} parent=1 // pred_check_branch
      %36 = sbr.rel (0) target = $region13
    $region12: #{tpu_custom_call.1} parent=1 // pred_region
      _
    $region13: #{tpu_custom_call.1} parent=1 // pred_fallthru
      _
    // Predicated region
    $region14: #{tpu_custom_call.1} parent=1 // pred_check
      _
    $region15: #{tpu_custom_call.1} parent=1 // pred_check_branch
      %38 = sbr.rel (0) target = $region17
    $region16: #{tpu_custom_call.1} parent=1 // pred_region
      %39 = dma.done [#allocation3], 128
    $region17: #{tpu_custom_call.1} parent=1 // pred_fallthru
      _
    // Predicated region
    $region18: #{tpu_custom_call.1} parent=1 // pred_check
      _
    $region19: #{tpu_custom_call.1} parent=1 // pred_check_branch
      %41 = sbr.rel (0) target = $region21
    $region20: #{tpu_custom_call.1} parent=1 // pred_region
      %42 = dma.done [#allocation6], 1024
    $region21: #{tpu_custom_call.1} parent=1 // pred_fallthru
      _
    %v44 = vld [vmem:[#allocation2] sm:$0xf]
    %v45 = vld [vmem:[#allocation2 + $0x4] sm:$0xf]
    %v46 = vld [vmem:[#allocation5] sm:$0xf]
    %v47 = vld [vmem:[#allocation5 + $0x4] sm:$0xf]
    %v48 = vld [vmem:[#allocation5 + $0x8] sm:$0xf]
    %v49 = vld [vmem:[#allocation5 + $0xc] sm:$0xf]
    %v50 = vld [vmem:[#allocation5 + $0x10] sm:$0xf]
    %v51 = vld [vmem:[#allocation5 + $0x14] sm:$0xf]
    %v52 = vld [vmem:[#allocation5 + $0x18] sm:$0xf]
    %v53 = vld [vmem:[#allocation5 + $0x1c] sm:$0xf]
    %v54 = vld [vmem:[#allocation5 + $0x20] sm:$0xf]
    %v55 = vld [vmem:[#allocation5 + $0x24] sm:$0xf]
    %v56 = vld [vmem:[#allocation5 + $0x28] sm:$0xf]
    %v57 = vld [vmem:[#allocation5 + $0x2c] sm:$0xf]
    %v58 = vld [vmem:[#allocation5 + $0x30] sm:$0xf]
    %v59 = vld [vmem:[#allocation5 + $0x34] sm:$0xf]
    %v60 = vld [vmem:[#allocation5 + $0x38] sm:$0xf]
    %v61 = vld [vmem:[#allocation5 + $0x3c] sm:$0xf]
    %v62 = vld [vmem:[%s2] sm:$0x1]
    %v64 = vlaneseq
    %v65 = vshrl.u32 %v64, 7
    %v66 = vsub.s32 0, %v65
    %v67 = vrot.slane %v62, %v66
    %v71 = vunpack.c.l.b16 %v44
    %v72 = vunpack.c.l.b16 %v45
    %v73 = vpack.c.b16 %v72, %v71
    %v91 = vunpack.c.l.b16 %v46
    %v92 = vunpack.c.l.b16 %v47
    %v93 = vunpack.c.l.b16 %v48
    %v94 = vunpack.c.l.b16 %v49
    %v95 = vunpack.c.l.b16 %v50
    %v96 = vunpack.c.l.b16 %v51
    %v97 = vunpack.c.l.b16 %v52
    %v98 = vunpack.c.l.b16 %v53
    %v99 = vunpack.c.l.b16 %v54
    %v100 = vunpack.c.l.b16 %v55
    %v101 = vunpack.c.l.b16 %v56
    %v102 = vunpack.c.l.b16 %v57
    %v103 = vunpack.c.l.b16 %v58
    %v104 = vunpack.c.l.b16 %v59
    %v105 = vunpack.c.l.b16 %v60
    %v106 = vunpack.c.l.b16 %v61
    %v107 = vpack.c.b16 %v92, %v91
    %v108 = vpack.c.b16 %v94, %v93
    %v109 = vpack.c.b16 %v96, %v95
    %v110 = vpack.c.b16 %v98, %v97
    %v111 = vpack.c.b16 %v100, %v99
    %v112 = vpack.c.b16 %v102, %v101
    %v113 = vpack.c.b16 %v104, %v103
    %v114 = vpack.c.b16 %v106, %v105
    %123 = vmatprep.subr.bf16.mxu0 0
    %124 = vmatpush1.bf16.msra.mxu0 %v107
    %125 = vmatprep.subr.bf16.mxu0 0
    %126 = vmatpush1.bf16.msra.mxu0 %v108
    %127 = vmatprep.subr.bf16.mxu0 0
    %128 = vmatpush1.bf16.msra.mxu0 %v109
    %129 = vmatprep.subr.bf16.mxu0 0
    %130 = vmatpush1.bf16.msra.mxu0 %v110
    %131 = vmatprep.subr.bf16.mxu0 0
    %132 = vmatpush1.bf16.msra.mxu0 %v111
    %133 = vmatprep.subr.bf16.mxu0 0
    %134 = vmatpush1.bf16.msra.mxu0 %v112
    %135 = vmatprep.subr.bf16.mxu0 0
    %136 = vmatpush1.bf16.msra.mxu0 %v113
    %137 = vmatprep.subr.bf16.mxu0 0
    %138 = vmatpush1.bf16.msra.mxu0 %v114
    %139 = vmatprep.subr.bf16.mxu0 0
    %140 = vmatpush1.bf16.msra.mxu0 0
    %141 = vmatprep.subr.bf16.mxu0 0
    %142 = vmatpush1.bf16.msra.mxu0 0
    %143 = vmatprep.subr.bf16.mxu0 0
    %144 = vmatpush1.bf16.msra.mxu0 0
    %145 = vmatprep.subr.bf16.mxu0 0
    %146 = vmatpush1.bf16.msra.mxu0 0
    %147 = vmatprep.subr.bf16.mxu0 0
    %148 = vmatpush1.bf16.msra.mxu0 0
    %149 = vmatprep.subr.bf16.mxu0 0
    %150 = vmatpush1.bf16.msra.mxu0 0
    %151 = vmatprep.subr.bf16.mxu0 0
    %152 = vmatpush1.bf16.msra.mxu0 0
    %153 = vmatprep.subr.bf16.mxu0 0
    %154 = vmatpush1.bf16.msra.mxu0 0
    %155 = vmatprep.mubr.bf16.mxu0 0
    %156 = vmatmul.mubr.bf16.gmra.mrb[0].mxu0 %v73
    %v157 = vpop.f32.mrb[0].mxu0
    %v158 = vadd.f32 %v67, %v157
    %v159 = vpop.f32.mrb[0].mxu0
    %v160 = vpop.f32.mrb[0].mxu0
    %v161 = vadd.f32 %v67, %v160
    %v162 = vpop.f32.mrb[0].mxu0
    %163 = vdwg.mxu0
    %v164 = vpack.c.bf16 %v161, %v158
    %v166 = vunpack.c.l.b16 %v164
    %v167 = vunpack.c.h.b16 %v164
    %v168 = vpack.c.b16 %v166, %v166
    %v169 = vpack.c.b16 %v167, %v167
    %172 = vst [vmem:[#allocation7] sm:$0xf] %v168
    %173 = vst [vmem:[#allocation7 + $0x4] sm:$0xf] %v169
    // Predicated region
    $region22: #{tpu_custom_call.1} parent=1 // pred_check
      _
    $region23: #{tpu_custom_call.1} parent=1 // pred_check_branch
      %175 = sbr.rel (0) target = $region25
    $region24: #{tpu_custom_call.1} parent=1 // pred_region
      %s177 = ssub.s32 128, 128
      %178 = vsyncadd [#allocation4], %s177
      %s179 = sshll.u32 [#allocation7], 4
      %s180 = int_to_ptr.vmem [resolvable:$true] %s179
      %185 = dma.vmem_to_hbm [thread:$0]  %s180, 128, %s3, [#allocation4], 64, 64, 4
    $region25: #{tpu_custom_call.1} parent=1 // pred_fallthru
      _
    // Predicated region
    $region26: #{tpu_custom_call.1} parent=1 // pred_check
      _
    $region27: #{tpu_custom_call.1} parent=1 // pred_check_branch
      %187 = sbr.rel (0) target = $region29
    $region28: #{tpu_custom_call.1} parent=1 // pred_region
      %188 = dma.done [#allocation4], 128
    $region29: #{tpu_custom_call.1} parent=1 // pred_fallthru
      _
    %189 = vsyncpa [#allocation3], 1
    %190 = vsyncpa [#allocation6], 1
    %191 = vsyncpa [#allocation4], 1

// kernel: tpu_custom_call.1
$region0: #{tpu_custom_call.1}
  #allocation0 [shape = 'u32[]', space=smem, size = 0x4, offset = 0x4, fixed_abs, tag = 'smem constant byte address 0x4 - core index']
  #allocation1 [shape = 'u32[144,128]{1,0:T(1,128)}', space=vmem, size = 0x12000, scoped, tag = 'internal scratch']
  %s0 = inlined_call_operand.hbm [shape: bf16[16,128], index: 0, kind: input, shape index: {}]
  %s1 = inlined_call_operand.hbm [shape: bf16[128,128], index: 1, kind: input, shape index: {}]
  %s2 = inlined_call_operand.vmem [shape: f32[1,128], index: 2, kind: input, shape index: {}]
  %s3 = inlined_call_operand.hbm [shape: bf16[16,128], index: 3, kind: output, shape index: {}]
  %s4 = sld [smem:[#allocation0]]
  $region30: #{tpu_custom_call.1} parent=0
    _
  %s6 = ssub.s32 1, %s4
  %s7 = scalar_select 0, %s6, %s4
  $region1: #{tpu_custom_call.1} parent=0
    #allocation2 [shape = 'u8[4096]{0}', space=vmem, size = 0x1000, scoped, tag = 'input window, operand 0, single buffered']
    #allocation3 [shape = 's32[1]{0}', space=sflag, size = 0x4, scoped, tag = 'scoped memory for tpu_custom_call.1']
    #allocation4 [shape = 's32[1]{0}', space=sflag, size = 0x4, scoped, tag = 'scoped memory for tpu_custom_call.1']
    #allocation5 [shape = 'u8[32768]{0}', space=vmem, size = 0x8000, scoped, tag = 'input window, operand 1, single buffered']
    #allocation6 [shape = 's32[1]{0}', space=sflag, size = 0x4, scoped, tag = 'scoped memory for tpu_custom_call.1']
    #allocation7 [shape = 'u8[4096]{0}', space=vmem, size = 0x1000, scoped, tag = 'output window, operand 0, single buffered']
    %8 = vsyncpa [#allocation3], 0
    %9 = vsyncpa [#allocation6], 0
    %10 = vsyncpa [#allocation4], 0
    // Predicated region
    $region2: #{tpu_custom_call.1} parent=1 // pred_check
      _
    $region3: #{tpu_custom_call.1} parent=1 // pred_check_branch
      %12 = sbr.rel (0) target = $region5
    $region4: #{tpu_custom_call.1} parent=1 // pred_region
      %s14 = ssub.s32 128, 128
      %15 = vsyncadd [#allocation3], %s14
      %s16 = sshll.u32 [#allocation2], 4
      %s17 = int_to_ptr.vmem [resolvable:$true] %s16
      %22 = dma.hbm_to_vmem [thread:$0]  %s0, 128, %s17, [#allocation3], 64, 64, 4
    $region5: #{tpu_custom_call.1} parent=1 // pred_fallthru
      _
    // Predicated region
    $region6: #{tpu_custom_call.1} parent=1 // pred_check
      _
    $region7: #{tpu_custom_call.1} parent=1 // pred_check_branch
      %24 = sbr.rel (0) target = $region9
    $region8: #{tpu_custom_call.1} parent=1 // pred_region
      %s26 = ssub.s32 1024, 1024
      %27 = vsyncadd [#allocation6], %s26
      %s28 = sshll.u32 [#allocation5], 4
      %s29 = int_to_ptr.vmem [resolvable:$true] %s28
      %34 = dma.hbm_to_vmem [thread:$0]  %s1, 1024, %s29, [#allocation6], 64, 64, 4
    $region9: #{tpu_custom_call.1} parent=1 // pred_fallthru
      _
    // Predicated region
    $region10: #{tpu_custom_call.1} parent=1 // pred_check
      _
    $region11: #{tpu_custom_call.1} parent=1 // pred_check_branch
      %36 = sbr.rel (0) target = $region13
    $region12: #{tpu_custom_call.1} parent=1 // pred_region
      _
    $region13: #{tpu_custom_call.1} parent=1 // pred_fallthru
      _
    // Predicated region
    $region14: #{tpu_custom_call.1} parent=1 // pred_check
      _
    $region15: #{tpu_custom_call.1} parent=1 // pred_check_branch
      %38 = sbr.rel (0) target = $region17
    $region16: #{tpu_custom_call.1} parent=1 // pred_region
      %39 = dma.done [#allocation3], 128
    $region17: #{tpu_custom_call.1} parent=1 // pred_fallthru
      _
    // Predicated region
    $region18: #{tpu_custom_call.1} parent=1 // pred_check
      _
    $region19: #{tpu_custom_call.1} parent=1 // pred_check_branch
      %41 = sbr.rel (0) target = $region21
    $region20: #{tpu_custom_call.1} parent=1 // pred_region
      %42 = dma.done [#allocation6], 1024
    $region21: #{tpu_custom_call.1} parent=1 // pred_fallthru
      _
    %v44 = vld [vmem:[#allocation2] sm:$0xf]
    %v45 = vld [vmem:[#allocation2 + $0x4] sm:$0xf]
    %v46 = vld [vmem:[#allocation5] sm:$0xf]
    %v47 = vld [vmem:[#allocation5 + $0x4] sm:$0xf]
    %v48 = vld [vmem:[#allocation5 + $0x8] sm:$0xf]
    %v49 = vld [vmem:[#allocation5 + $0xc] sm:$0xf]
    %v50 = vld [vmem:[#allocation5 + $0x10] sm:$0xf]
    %v51 = vld [vmem:[#allocation5 + $0x14] sm:$0xf]
    %v52 = vld [vmem:[#allocation5 + $0x18] sm:$0xf]
    %v53 = vld [vmem:[#allocation5 + $0x1c] sm:$0xf]
    %v54 = vld [vmem:[#allocation5 + $0x20] sm:$0xf]
    %v55 = vld [vmem:[#allocation5 + $0x24] sm:$0xf]
    %v56 = vld [vmem:[#allocation5 + $0x28] sm:$0xf]
    %v57 = vld [vmem:[#allocation5 + $0x2c] sm:$0xf]
    %v58 = vld [vmem:[#allocation5 + $0x30] sm:$0xf]
    %v59 = vld [vmem:[#allocation5 + $0x34] sm:$0xf]
    %v60 = vld [vmem:[#allocation5 + $0x38] sm:$0xf]
    %v61 = vld [vmem:[#allocation5 + $0x3c] sm:$0xf]
    %v62 = vld [vmem:[%s2] sm:$0x1]
    %v64 = vlaneseq
    %v65 = vshrl.u32 %v64, 7
    %v66 = vsub.s32 0, %v65
    %v67 = vrot.slane %v62, %v66
    %v71 = vunpack.c.l.b16 %v44
    %v72 = vunpack.c.l.b16 %v45
    %v73 = vpack.c.b16 %v72, %v71
    %v91 = vunpack.c.l.b16 %v46
    %v92 = vunpack.c.l.b16 %v47
    %v93 = vunpack.c.l.b16 %v48
    %v94 = vunpack.c.l.b16 %v49
    %v95 = vunpack.c.l.b16 %v50
    %v96 = vunpack.c.l.b16 %v51
    %v97 = vunpack.c.l.b16 %v52
    %v98 = vunpack.c.l.b16 %v53
    %v99 = vunpack.c.l.b16 %v54
    %v100 = vunpack.c.l.b16 %v55
    %v101 = vunpack.c.l.b16 %v56
    %v102 = vunpack.c.l.b16 %v57
    %v103 = vunpack.c.l.b16 %v58
    %v104 = vunpack.c.l.b16 %v59
    %v105 = vunpack.c.l.b16 %v60
    %v106 = vunpack.c.l.b16 %v61
    %v107 = vpack.c.b16 %v92, %v91
    %v108 = vpack.c.b16 %v94, %v93
    %v109 = vpack.c.b16 %v96, %v95
    %v110 = vpack.c.b16 %v98, %v97
    %v111 = vpack.c.b16 %v100, %v99
    %v112 = vpack.c.b16 %v102, %v101
    %v113 = vpack.c.b16 %v104, %v103
    %v114 = vpack.c.b16 %v106, %v105
    %123 = vmatprep.subr.bf16.mxu0 0
    %124 = vmatpush1.bf16.msra.mxu0 %v107
    %125 = vmatprep.subr.bf16.mxu0 0
    %126 = vmatpush1.bf16.msra.mxu0 %v108
    %127 = vmatprep.subr.bf16.mxu0 0
    %128 = vmatpush1.bf16.msra.mxu0 %v109
    %129 = vmatprep.subr.bf16.mxu0 0
    %130 = vmatpush1.bf16.msra.mxu0 %v110
    %131 = vmatprep.subr.bf16.mxu0 0
    %132 = vmatpush1.bf16.msra.mxu0 %v111
    %133 = vmatprep.subr.bf16.mxu0 0
    %134 = vmatpush1.bf16.msra.mxu0 %v112
    %135 = vmatprep.subr.bf16.mxu0 0
    %136 = vmatpush1.bf16.msra.mxu0 %v113
    %137 = vmatprep.subr.bf16.mxu0 0
    %138 = vmatpush1.bf16.msra.mxu0 %v114
    %139 = vmatprep.subr.bf16.mxu0 0
    %140 = vmatpush1.bf16.msra.mxu0 0
    %141 = vmatprep.subr.bf16.mxu0 0
    %142 = vmatpush1.bf16.msra.mxu0 0
    %143 = vmatprep.subr.bf16.mxu0 0
    %144 = vmatpush1.bf16.msra.mxu0 0
    %145 = vmatprep.subr.bf16.mxu0 0
    %146 = vmatpush1.bf16.msra.mxu0 0
    %147 = vmatprep.subr.bf16.mxu0 0
    %148 = vmatpush1.bf16.msra.mxu0 0
    %149 = vmatprep.subr.bf16.mxu0 0
    %150 = vmatpush1.bf16.msra.mxu0 0
    %151 = vmatprep.subr.bf16.mxu0 0
    %152 = vmatpush1.bf16.msra.mxu0 0
    %153 = vmatprep.subr.bf16.mxu0 0
    %154 = vmatpush1.bf16.msra.mxu0 0
    %155 = vmatprep.mubr.bf16.mxu0 0
    %156 = vmatmul.mubr.bf16.gmra.mrb[0].mxu0 %v73
    %v157 = vpop.f32.mrb[0].mxu0
    %v158 = vadd.f32 %v67, %v157
    %v159 = vpop.f32.mrb[0].mxu0
    %v160 = vpop.f32.mrb[0].mxu0
    %v161 = vadd.f32 %v67, %v160
    %v162 = vpop.f32.mrb[0].mxu0
    %163 = vdwg.mxu0
    %v164 = vpack.c.bf16 %v161, %v158
    %v166 = vunpack.c.l.b16 %v164
    %v167 = vunpack.c.h.b16 %v164
    %v168 = vpack.c.b16 %v166, %v166
    %v169 = vpack.c.b16 %v167, %v167
    %172 = vst [vmem:[#allocation7] sm:$0xf] %v168
    %173 = vst [vmem:[#allocation7 + $0x4] sm:$0xf] %v169
    // Predicated region
    $region22: #{tpu_custom_call.1} parent=1 // pred_check
      _
    $region23: #{tpu_custom_call.1} parent=1 // pred_check_branch
      %175 = sbr.rel (0) target = $region25
    $region24: #{tpu_custom_call.1} parent=1 // pred_region
      %s177 = ssub.s32 128, 128
      %178 = vsyncadd [#allocation4], %s177
      %s179 = sshll.u32 [#allocation7], 4
      %s180 = int_to_ptr.vmem [resolvable:$true] %s179
      %185 = dma.vmem_to_hbm [thread:$0]  %s180, 128, %s3, [#allocation4], 64, 64, 4
    $region25: #{tpu_custom_call.1} parent=1 // pred_fallthru
      _
    // Predicated region
    $region26: #{tpu_custom_call.1} parent=1 // pred_check
      _
    $region27: #{tpu_custom_call.1} parent=1 // pred_check_branch
      %187 = sbr.rel (0) target = $region29
    $region28: #{tpu_custom_call.1} parent=1 // pred_region
      %188 = dma.done [#allocation4], 128
    $region29: #{tpu_custom_call.1} parent=1 // pred_fallthru
      _
    %189 = vsyncpa [#allocation3], 1
    %190 = vsyncpa [#allocation6], 1
    %191 = vsyncpa [#allocation4], 1

</llo_original>
